<compile_context>
chip_gen: v6e
topology: v6e:2x2x1
jax: 0.10.0
libtpu: 0.0.40
codegen_flags: <defaults>
</compile_context>

<pallas_src>
import jax
import jax.numpy as jnp
from jax.experimental import pallas as pl
from jax.experimental.pallas import tpu as pltpu


_KEEP_PROB = 0.8
_KEEP_SCALE = 1.0 / _KEEP_PROB                     # 1.25, exact in f32
_KEEP_THRESH_24 = round(_KEEP_PROB * (1 << 24))    # rounded 24-bit threshold


def _round_up(x, m):
    return (x + m - 1) // m * m


def _layer_salt(seed, pid, layer_idx):
    """Scalar int32 salt, distinct per (call seed, batch tile, layer)."""
    base = seed * jnp.int32(1000003) + (pid + jnp.int32(1)) * jnp.int32(83492791)
    return base ^ jnp.int32((layer_idx + 1) * 1000003)


def _keep_mask(shape, salt):
    """Counter-based hash PRNG -> boolean keep mask with P(keep) ~= 0.8.

    Pure int32 arithmetic (wrapping mul, xor, shifts) so it lowers identically
    under Mosaic and under the CPU interpreter; logical right shifts are
    emulated with (arithmetic shift & mask).
    """
    r = jax.lax.broadcasted_iota(jnp.int32, shape, 0)
    c = jax.lax.broadcasted_iota(jnp.int32, shape, 1)
    x = (r * jnp.int32(-1640531535)) ^ (c * jnp.int32(-2048144777)) ^ salt
    x = x ^ ((x >> 16) & jnp.int32(0x0000FFFF))
    x = x * jnp.int32(0x7FEB352D)
    x = x ^ ((x >> 15) & jnp.int32(0x0001FFFF))
    x = x * jnp.int32(-2073298805)
    x = x ^ ((x >> 16) & jnp.int32(0x0000FFFF))
    u24 = (x >> 8) & jnp.int32(0x00FFFFFF)          # 24 uniform bits in [0, 2^24)
    return u24 < jnp.int32(_KEEP_THRESH_24)


def _elu(v):
    # ELU(alpha=1).  exp(min(v, 0)) - 1 instead of expm1 (no guaranteed Mosaic
    # lowering for expm1); the min() also keeps the dead branch finite.
    return jnp.where(v > 0, v,
                     jnp.exp(jnp.minimum(v, jnp.float32(0.0))) - jnp.float32(1.0))


def _dropout(v, salt):
    keep = _keep_mask(v.shape, salt)
    return jnp.where(keep, v * jnp.float32(_KEEP_SCALE), jnp.float32(0.0))


def _mlp_kernel(seed_ref, uidx_ref, iidx_ref, eu_ref, ei_ref, *args):
    """args = (w0, b0, ..., w_{L-1}, b_{L-1}, wo, bo, out_ref).

    Layout: activations are (features, TILE_B); weights are torch (out, in);
    biases are (out, 1); head weight is (hidden_last, 1); the output block is a
    lane-dense (1, TILE_B) row.
    """
    out_ref = args[-1]
    wo_ref, bo_ref = args[-3], args[-2]
    layer_wb = args[:-3]
    num_layers = len(layer_wb) // 2

    tile_b = uidx_ref.shape[1]
    num_users = eu_ref.shape[1]
    num_items = ei_ref.shape[1]

    seed = seed_ref[0]
    pid = pl.program_id(0)

    # ---- fused embedding gather (one-hot matmul; tables resident in VMEM) ----
    # TODO(synk): for large embedding tables replace the one-hot matmul with a
    # scalar-prefetch row gather (pl.Element index_map / manual DMA).
    u_idx = uidx_ref[...]                                   # (1, TILE_B) int32
    i_idx = iidx_ref[...]
    u_rows = jax.lax.broadcasted_iota(jnp.int32, (num_users, tile_b), 0)
    i_rows = jax.lax.broadcasted_iota(jnp.int32, (num_items, tile_b), 0)
    one, zero = jnp.float32(1.0), jnp.float32(0.0)
    u_onehot = jnp.where(u_rows == u_idx, one, zero)        # (num_users, TILE_B)
    i_onehot = jnp.where(i_rows == i_idx, one, zero)        # (num_items, TILE_B)
    ue = jnp.dot(eu_ref[...], u_onehot, preferred_element_type=jnp.float32)
    ie = jnp.dot(ei_ref[...], i_onehot, preferred_element_type=jnp.float32)

    # torch.cat([user_emb, item_emb], dim=-1) == sublane concat in this layout.
    v = jnp.concatenate([ue, ie], axis=0)                   # (2*latent, TILE_B)

    # ---- [Linear -> ELU -> Dropout(0.2)] * num_layers -------------------------
    for l in range(num_layers):
        w_ref, b_ref = layer_wb[2 * l], layer_wb[2 * l + 1]
        v = jnp.dot(w_ref[...], v, preferred_element_type=jnp.float32) + b_ref[...]
        v = _elu(v)
        v = _dropout(v, _layer_salt(seed, pid, l))

    # ---- affine head: VPU multiply + sublane reduce (keeps the degenerate
    # 1-wide matmul off the MXU) -> lane-dense (1, TILE_B) output block ---------
    out_ref[...] = jnp.sum(v * wo_ref[...], axis=0, keepdims=True) + bo_ref[...]


def ncf_mlp_forward(user_indices, item_indices, params, seed=0, tile_b=4096):
    """Forward pass. Returns (B, 1) f32 logits (Sigmoid NOT applied, matching
    the torch module's forward()).  Wrap in jax.jit for production dispatch."""
    B = int(user_indices.shape[0])
    user_indices = user_indices.astype(jnp.int32)
    item_indices = item_indices.astype(jnp.int32)

    # Tile the batch: one full-size tile for small batches, 128-lane-aligned
    # tiles (pipelined / megacore-parallel) otherwise.
    if B <= tile_b:
        tile_b = _round_up(max(B, 1), 8)
    else:
        tile_b = _round_up(tile_b, 128)
    b_padded = _round_up(B, tile_b)
    if b_padded != B:
        pad = b_padded - B
        user_indices = jnp.concatenate([user_indices, jnp.zeros((pad,), jnp.int32)])
        item_indices = jnp.concatenate([item_indices, jnp.zeros((pad,), jnp.int32)])
    u2d = user_indices.reshape(1, b_padded)
    i2d = item_indices.reshape(1, b_padded)
    seed_arr = jnp.full((1,), seed, dtype=jnp.int32)

    flat_wb = []
    for w, b in params["layers"]:
        flat_wb += [w, b]
    weights = (params["emb_user_t"], params["emb_item_t"], *flat_wb,
               params["wo"], params["bo"])
    operands = (seed_arr, u2d, i2d, *weights)

    idx_spec = pl.BlockSpec((1, tile_b), lambda i: (0, i))
    in_specs = (
        [pl.BlockSpec(memory_space=pltpu.MemorySpace.SMEM)]      # seed scalar
        + [idx_spec, idx_spec]                                   # user / item ids
        # Tables, weights and biases: constant index_map -> fetched once and
        # kept resident in VMEM across all batch tiles.
        + [pl.BlockSpec(w.shape, lambda i: (0, 0)) for w in weights]
    )

    out = pl.pallas_call(
        _mlp_kernel,
        grid=(b_padded // tile_b,),
        in_specs=in_specs,
        out_specs=pl.BlockSpec((1, tile_b), lambda i: (0, i)),
        out_shape=jax.ShapeDtypeStruct((1, b_padded), jnp.float32),
        compiler_params=pltpu.CompilerParams(
            dimension_semantics=("parallel",)),  # batch tiles across TCs on v7x
    )(*operands)
    return out[0, :B].reshape(B, 1)


def init_params(key, num_users, num_items, latent_dim, mlp_layers):
    """Same distributions/shapes as the torch module, in kernel-friendly layouts:
      emb_*_t : (latent_dim, num_rows)            -- embedding tables, transposed
      layers  : [(W (out,in), b (out,1)), ...]    -- torch Linear layout
      wo      : (mlp_layers[-1], 1), bo: (1, 1)   -- affine head (transposed)
    """
    assert mlp_layers[0] == 2 * latent_dim
    n_layers = len(mlp_layers) - 1
    keys = iter(jax.random.split(key, 4 + 2 * n_layers))
    params = {
        "emb_user_t": jax.random.normal(next(keys), (latent_dim, num_users), jnp.float32),
        "emb_item_t": jax.random.normal(next(keys), (latent_dim, num_items), jnp.float32),
        "layers": [],
    }
    for in_size, out_size in zip(mlp_layers[:-1], mlp_layers[1:]):
        bound = 1.0 / (in_size ** 0.5)
        w = jax.random.uniform(next(keys), (out_size, in_size), jnp.float32, -bound, bound)
        b = jax.random.uniform(next(keys), (out_size, 1), jnp.float32, -bound, bound)
        params["layers"].append((w, b))
    bound = 1.0 / (mlp_layers[-1] ** 0.5)
    params["wo"] = jax.random.uniform(next(keys), (mlp_layers[-1], 1), jnp.float32, -bound, bound)
    params["bo"] = jax.random.uniform(next(keys), (1, 1), jnp.float32, -bound, bound)
    return params


def reference_forward(user_indices, item_indices, params, seed=0):
    """Pure-JAX mirror of the kernel math (valid for batches inside the first
    batch tile, i.e. pid == 0); used as a correctness cross-check."""
    ue = params["emb_user_t"][:, user_indices]               # (latent, B)
    ie = params["emb_item_t"][:, item_indices]
    v = jnp.concatenate([ue, ie], axis=0)
    seed32, pid0 = jnp.int32(seed), jnp.int32(0)
    with jax.default_matmul_precision("highest"):
        for l, (w, b) in enumerate(params["layers"]):
            v = jnp.dot(w, v) + b
            v = _elu(v)
            v = _dropout(v, _layer_salt(seed32, pid0, l))
        out = jnp.sum(v * params["wo"], axis=0, keepdims=True) + params["bo"]
    return out.T                                              # (B, 1)


if __name__ == "__main__":
    config = {
        "num_users": 32,
        "num_items": 48,
        "latent_dim_mlp": 16,
        "mlp_layers": [32, 32, 16, 8],   # mlp_layers[0] == 2 * latent_dim_mlp
    }
    key = jax.random.PRNGKey(0)
    k_params, k_user, k_item = jax.random.split(key, 3)
    params = init_params(k_params, config["num_users"], config["num_items"],
                         config["latent_dim_mlp"], config["mlp_layers"])

    # --- small batch: single tile --------------------------------------------
    batch = 8
    user_idx = jax.random.randint(k_user, (batch,), 0, config["num_users"], dtype=jnp.int32)
    item_idx = jax.random.randint(k_item, (batch,), 0, config["num_items"], dtype=jnp.int32)
    logits = jax.block_until_ready(ncf_mlp_forward(user_idx, item_idx, params, seed=0))
    assert logits.shape == (batch, 1) and logits.dtype == jnp.float32
    ref = reference_forward(user_idx, item_idx, params, seed=0)
    assert jnp.allclose(logits, ref, rtol=2e-2, atol=2e-2)

    # --- larger batch: exercises the batch grid (3 tiles of 128) + padding ----
    big = 300
    ku, kib = jax.random.split(jax.random.PRNGKey(1))
    user_big = jax.random.randint(ku, (big,), 0, config["num_users"], dtype=jnp.int32)
    item_big = jax.random.randint(kib, (big,), 0, config["num_items"], dtype=jnp.int32)
    logits_big = jax.block_until_ready(
        ncf_mlp_forward(user_big, item_big, params, seed=3, tile_b=128))
    assert logits_big.shape == (big, 1)
    ref0 = reference_forward(user_big[:128], item_big[:128], params, seed=3)
    assert jnp.allclose(logits_big[:128], ref0, rtol=2e-2, atol=2e-2)

    print("KERNEL_OK")
</pallas_src>

<mosaic_0001>
module attributes {stable_mosaic.version = 11 : i64} {
  func.func @_mlp_kernel(%arg0: i32, %arg1: memref<1xi32, #tpu.memory_space<smem>>, %arg2: memref<1x8xi32, #tpu.memory_space<vmem>>, %arg3: memref<1x8xi32, #tpu.memory_space<vmem>>, %arg4: memref<16x32xf32, #tpu.memory_space<vmem>>, %arg5: memref<16x48xf32, #tpu.memory_space<vmem>>, %arg6: memref<32x32xf32, #tpu.memory_space<vmem>>, %arg7: memref<32x1xf32, #tpu.memory_space<vmem>>, %arg8: memref<16x32xf32, #tpu.memory_space<vmem>>, %arg9: memref<16x1xf32, #tpu.memory_space<vmem>>, %arg10: memref<8x16xf32, #tpu.memory_space<vmem>>, %arg11: memref<8x1xf32, #tpu.memory_space<vmem>>, %arg12: memref<8x1xf32, #tpu.memory_space<vmem>>, %arg13: memref<1x1xf32, #tpu.memory_space<vmem>>, %arg14: memref<1x8xf32, #tpu.memory_space<vmem>>) attributes {dimension_semantics = [#tpu.dimension_semantics<parallel>], iteration_bounds = array<i64: 1>, scalar_prefetch = 0 : i64, scratch_operands = 0 : i64, tpu.core_type = #tpu.core_type<tc>, window_params = [{transform_indices = @transform_0, window_bounds = array<i64: 1>}, {transform_indices = @transform_1, window_bounds = array<i64: 1, 8>}, {transform_indices = @transform_2, window_bounds = array<i64: 1, 8>}, {pipeline_mode = #tpu.pipeline_mode<synchronous>, transform_indices = @transform_3, window_bounds = array<i64: 16, 32>}, {pipeline_mode = #tpu.pipeline_mode<synchronous>, transform_indices = @transform_4, window_bounds = array<i64: 16, 48>}, {pipeline_mode = #tpu.pipeline_mode<synchronous>, transform_indices = @transform_5, window_bounds = array<i64: 32, 32>}, {pipeline_mode = #tpu.pipeline_mode<synchronous>, transform_indices = @transform_6, window_bounds = array<i64: 32, 1>}, {pipeline_mode = #tpu.pipeline_mode<synchronous>, transform_indices = @transform_7, window_bounds = array<i64: 16, 32>}, {pipeline_mode = #tpu.pipeline_mode<synchronous>, transform_indices = @transform_8, window_bounds = array<i64: 16, 1>}, {pipeline_mode = #tpu.pipeline_mode<synchronous>, transform_indices = @transform_9, window_bounds = array<i64: 8, 16>}, {pipeline_mode = #tpu.pipeline_mode<synchronous>, transform_indices = @transform_10, window_bounds = array<i64: 8, 1>}, {pipeline_mode = #tpu.pipeline_mode<synchronous>, transform_indices = @transform_11, window_bounds = array<i64: 8, 1>}, {pipeline_mode = #tpu.pipeline_mode<synchronous>, transform_indices = @transform_12, window_bounds = array<i64: 1, 1>}, {transform_indices = @transform_13, window_bounds = array<i64: 1, 8>}]} {
    %c0 = arith.constant 0 : index
    %0 = memref.load %arg1[%c0] : memref<1xi32, #tpu.memory_space<smem>>
    %c0_0 = arith.constant 0 : index
    %c0_1 = arith.constant 0 : index
    %1 = vector.load %arg2[%c0_0, %c0_1] : memref<1x8xi32, #tpu.memory_space<vmem>>, vector<1x8xi32>
    %c0_2 = arith.constant 0 : index
    %c0_3 = arith.constant 0 : index
    %2 = vector.load %arg3[%c0_2, %c0_3] : memref<1x8xi32, #tpu.memory_space<vmem>>, vector<1x8xi32>
    %3 = tpu.iota {dimensions = array<i32: 0>} : vector<32x8xi32>
    %4 = tpu.iota {dimensions = array<i32: 0>} : vector<48x8xi32>
    %5 = vector.broadcast %1 : vector<1x8xi32> to vector<32x8xi32>
    %6 = arith.cmpi eq, %3, %5 : vector<32x8xi32>
    %cst = arith.constant 1.000000e+00 : f32
    %cst_4 = arith.constant 0.000000e+00 : f32
    %7 = vector.broadcast %cst : f32 to vector<32x8xf32>
    %8 = vector.broadcast %cst_4 : f32 to vector<32x8xf32>
    %9 = arith.select %6, %7, %8 : vector<32x8xi1>, vector<32x8xf32>
    %10 = vector.broadcast %2 : vector<1x8xi32> to vector<48x8xi32>
    %11 = arith.cmpi eq, %4, %10 : vector<48x8xi32>
    %cst_5 = arith.constant 1.000000e+00 : f32
    %cst_6 = arith.constant 0.000000e+00 : f32
    %12 = vector.broadcast %cst_5 : f32 to vector<48x8xf32>
    %13 = vector.broadcast %cst_6 : f32 to vector<48x8xf32>
    %14 = arith.select %11, %12, %13 : vector<48x8xi1>, vector<48x8xf32>
    %c0_7 = arith.constant 0 : index
    %c0_8 = arith.constant 0 : index
    %15 = vector.load %arg4[%c0_7, %c0_8] : memref<16x32xf32, #tpu.memory_space<vmem>>, vector<16x32xf32>
    %cst_9 = arith.constant dense<0.000000e+00> : vector<16x8xf32>
    %16 = tpu.matmul %15, %9, %cst_9 {dimension_numbers = #tpu.dot_dimension_numbers<[1], [0], [0], [1], [0, 0, 1, 1], [], []>} : vector<16x32xf32>, vector<32x8xf32>, vector<16x8xf32> -> vector<16x8xf32>
    %c0_10 = arith.constant 0 : index
    %c0_11 = arith.constant 0 : index
    %17 = vector.load %arg5[%c0_10, %c0_11] : memref<16x48xf32, #tpu.memory_space<vmem>>, vector<16x48xf32>
    %cst_12 = arith.constant dense<0.000000e+00> : vector<16x8xf32>
    %18 = tpu.matmul %17, %14, %cst_12 {dimension_numbers = #tpu.dot_dimension_numbers<[1], [0], [0], [1], [0, 0, 1, 1], [], []>} : vector<16x48xf32>, vector<48x8xf32>, vector<16x8xf32> -> vector<16x8xf32>
    %19 = tpu.concatenate %16, %18 in 0 : vector<16x8xf32>, vector<16x8xf32> -> vector<32x8xf32>
    %c0_13 = arith.constant 0 : index
    %c0_14 = arith.constant 0 : index
    %20 = vector.load %arg6[%c0_13, %c0_14] : memref<32x32xf32, #tpu.memory_space<vmem>>, vector<32x32xf32>
    %cst_15 = arith.constant dense<0.000000e+00> : vector<32x8xf32>
    %21 = tpu.matmul %20, %19, %cst_15 {dimension_numbers = #tpu.dot_dimension_numbers<[1], [0], [0], [1], [0, 0, 1, 1], [], []>} : vector<32x32xf32>, vector<32x8xf32>, vector<32x8xf32> -> vector<32x8xf32>
    %c0_16 = arith.constant 0 : index
    %c0_17 = arith.constant 0 : index
    %22 = vector.load %arg7[%c0_16, %c0_17] : memref<32x1xf32, #tpu.memory_space<vmem>>, vector<32x1xf32>
    %23 = vector.broadcast %22 : vector<32x1xf32> to vector<32x8xf32>
    %24 = arith.addf %21, %23 : vector<32x8xf32>
    %cst_18 = arith.constant 0.000000e+00 : f32
    %25 = vector.broadcast %cst_18 : f32 to vector<32x8xf32>
    %26 = arith.cmpf ogt, %24, %25 : vector<32x8xf32>
    %cst_19 = arith.constant 0.000000e+00 : f32
    %27 = vector.broadcast %cst_19 : f32 to vector<32x8xf32>
    %28 = arith.minimumf %24, %27 : vector<32x8xf32>
    %29 = math.exp %28 : vector<32x8xf32>
    %cst_20 = arith.constant 1.000000e+00 : f32
    %30 = vector.broadcast %cst_20 : f32 to vector<32x8xf32>
    %31 = arith.subf %29, %30 : vector<32x8xf32>
    %32 = arith.select %26, %24, %31 : vector<32x8xi1>, vector<32x8xf32>
    %c1000003_i32 = arith.constant 1000003 : i32
    %33 = arith.muli %0, %c1000003_i32 : i32
    %c1_i32 = arith.constant 1 : i32
    %34 = arith.addi %arg0, %c1_i32 : i32
    %c83492791_i32 = arith.constant 83492791 : i32
    %35 = arith.muli %34, %c83492791_i32 : i32
    %36 = arith.addi %33, %35 : i32
    %c1000003_i32_21 = arith.constant 1000003 : i32
    %37 = arith.xori %36, %c1000003_i32_21 : i32
    %38 = tpu.iota {dimensions = array<i32: 0>} : vector<32x8xi32>
    %39 = tpu.iota {dimensions = array<i32: 1>} : vector<32x8xi32>
    %c-1640531535_i32 = arith.constant -1640531535 : i32
    %40 = vector.broadcast %c-1640531535_i32 : i32 to vector<32x8xi32>
    %41 = arith.muli %38, %40 : vector<32x8xi32>
    %c-2048144777_i32 = arith.constant -2048144777 : i32
    %42 = vector.broadcast %c-2048144777_i32 : i32 to vector<32x8xi32>
    %43 = arith.muli %39, %42 : vector<32x8xi32>
    %44 = arith.xori %41, %43 : vector<32x8xi32>
    %45 = vector.broadcast %37 : i32 to vector<32x8xi32>
    %46 = arith.xori %44, %45 : vector<32x8xi32>
    %c16_i32 = arith.constant 16 : i32
    %47 = vector.broadcast %c16_i32 : i32 to vector<32x8xi32>
    %48 = arith.shrsi %46, %47 : vector<32x8xi32>
    %c65535_i32 = arith.constant 65535 : i32
    %49 = vector.broadcast %c65535_i32 : i32 to vector<32x8xi32>
    %50 = arith.andi %48, %49 : vector<32x8xi32>
    %51 = arith.xori %46, %50 : vector<32x8xi32>
    %c2146121005_i32 = arith.constant 2146121005 : i32
    %52 = vector.broadcast %c2146121005_i32 : i32 to vector<32x8xi32>
    %53 = arith.muli %51, %52 : vector<32x8xi32>
    %c15_i32 = arith.constant 15 : i32
    %54 = vector.broadcast %c15_i32 : i32 to vector<32x8xi32>
    %55 = arith.shrsi %53, %54 : vector<32x8xi32>
    %c131071_i32 = arith.constant 131071 : i32
    %56 = vector.broadcast %c131071_i32 : i32 to vector<32x8xi32>
    %57 = arith.andi %55, %56 : vector<32x8xi32>
    %58 = arith.xori %53, %57 : vector<32x8xi32>
    %c-2073298805_i32 = arith.constant -2073298805 : i32
    %59 = vector.broadcast %c-2073298805_i32 : i32 to vector<32x8xi32>
    %60 = arith.muli %58, %59 : vector<32x8xi32>
    %c16_i32_22 = arith.constant 16 : i32
    %61 = vector.broadcast %c16_i32_22 : i32 to vector<32x8xi32>
    %62 = arith.shrsi %60, %61 : vector<32x8xi32>
    %c65535_i32_23 = arith.constant 65535 : i32
    %63 = vector.broadcast %c65535_i32_23 : i32 to vector<32x8xi32>
    %64 = arith.andi %62, %63 : vector<32x8xi32>
    %65 = arith.xori %60, %64 : vector<32x8xi32>
    %c8_i32 = arith.constant 8 : i32
    %66 = vector.broadcast %c8_i32 : i32 to vector<32x8xi32>
    %67 = arith.shrsi %65, %66 : vector<32x8xi32>
    %c16777215_i32 = arith.constant 16777215 : i32
    %68 = vector.broadcast %c16777215_i32 : i32 to vector<32x8xi32>
    %69 = arith.andi %67, %68 : vector<32x8xi32>
    %c13421773_i32 = arith.constant 13421773 : i32
    %70 = vector.broadcast %c13421773_i32 : i32 to vector<32x8xi32>
    %71 = arith.cmpi slt, %69, %70 : vector<32x8xi32>
    %cst_24 = arith.constant 1.250000e+00 : f32
    %72 = vector.broadcast %cst_24 : f32 to vector<32x8xf32>
    %73 = arith.mulf %32, %72 : vector<32x8xf32>
    %cst_25 = arith.constant 0.000000e+00 : f32
    %74 = vector.broadcast %cst_25 : f32 to vector<32x8xf32>
    %75 = arith.select %71, %73, %74 : vector<32x8xi1>, vector<32x8xf32>
    %c0_26 = arith.constant 0 : index
    %c0_27 = arith.constant 0 : index
    %76 = vector.load %arg8[%c0_26, %c0_27] : memref<16x32xf32, #tpu.memory_space<vmem>>, vector<16x32xf32>
    %cst_28 = arith.constant dense<0.000000e+00> : vector<16x8xf32>
    %77 = tpu.matmul %76, %75, %cst_28 {dimension_numbers = #tpu.dot_dimension_numbers<[1], [0], [0], [1], [0, 0, 1, 1], [], []>} : vector<16x32xf32>, vector<32x8xf32>, vector<16x8xf32> -> vector<16x8xf32>
    %c0_29 = arith.constant 0 : index
    %c0_30 = arith.constant 0 : index
    %78 = vector.load %arg9[%c0_29, %c0_30] : memref<16x1xf32, #tpu.memory_space<vmem>>, vector<16x1xf32>
    %79 = vector.broadcast %78 : vector<16x1xf32> to vector<16x8xf32>
    %80 = arith.addf %77, %79 : vector<16x8xf32>
    %cst_31 = arith.constant 0.000000e+00 : f32
    %81 = vector.broadcast %cst_31 : f32 to vector<16x8xf32>
    %82 = arith.cmpf ogt, %80, %81 : vector<16x8xf32>
    %cst_32 = arith.constant 0.000000e+00 : f32
    %83 = vector.broadcast %cst_32 : f32 to vector<16x8xf32>
    %84 = arith.minimumf %80, %83 : vector<16x8xf32>
    %85 = math.exp %84 : vector<16x8xf32>
    %cst_33 = arith.constant 1.000000e+00 : f32
    %86 = vector.broadcast %cst_33 : f32 to vector<16x8xf32>
    %87 = arith.subf %85, %86 : vector<16x8xf32>
    %88 = arith.select %82, %80, %87 : vector<16x8xi1>, vector<16x8xf32>
    %c1000003_i32_34 = arith.constant 1000003 : i32
    %89 = arith.muli %0, %c1000003_i32_34 : i32
    %c1_i32_35 = arith.constant 1 : i32
    %90 = arith.addi %arg0, %c1_i32_35 : i32
    %c83492791_i32_36 = arith.constant 83492791 : i32
    %91 = arith.muli %90, %c83492791_i32_36 : i32
    %92 = arith.addi %89, %91 : i32
    %c2000006_i32 = arith.constant 2000006 : i32
    %93 = arith.xori %92, %c2000006_i32 : i32
    %94 = tpu.iota {dimensions = array<i32: 0>} : vector<16x8xi32>
    %95 = tpu.iota {dimensions = array<i32: 1>} : vector<16x8xi32>
    %c-1640531535_i32_37 = arith.constant -1640531535 : i32
    %96 = vector.broadcast %c-1640531535_i32_37 : i32 to vector<16x8xi32>
    %97 = arith.muli %94, %96 : vector<16x8xi32>
    %c-2048144777_i32_38 = arith.constant -2048144777 : i32
    %98 = vector.broadcast %c-2048144777_i32_38 : i32 to vector<16x8xi32>
    %99 = arith.muli %95, %98 : vector<16x8xi32>
    %100 = arith.xori %97, %99 : vector<16x8xi32>
    %101 = vector.broadcast %93 : i32 to vector<16x8xi32>
    %102 = arith.xori %100, %101 : vector<16x8xi32>
    %c16_i32_39 = arith.constant 16 : i32
    %103 = vector.broadcast %c16_i32_39 : i32 to vector<16x8xi32>
    %104 = arith.shrsi %102, %103 : vector<16x8xi32>
    %c65535_i32_40 = arith.constant 65535 : i32
    %105 = vector.broadcast %c65535_i32_40 : i32 to vector<16x8xi32>
    %106 = arith.andi %104, %105 : vector<16x8xi32>
    %107 = arith.xori %102, %106 : vector<16x8xi32>
    %c2146121005_i32_41 = arith.constant 2146121005 : i32
    %108 = vector.broadcast %c2146121005_i32_41 : i32 to vector<16x8xi32>
    %109 = arith.muli %107, %108 : vector<16x8xi32>
    %c15_i32_42 = arith.constant 15 : i32
    %110 = vector.broadcast %c15_i32_42 : i32 to vector<16x8xi32>
    %111 = arith.shrsi %109, %110 : vector<16x8xi32>
    %c131071_i32_43 = arith.constant 131071 : i32
    %112 = vector.broadcast %c131071_i32_43 : i32 to vector<16x8xi32>
    %113 = arith.andi %111, %112 : vector<16x8xi32>
    %114 = arith.xori %109, %113 : vector<16x8xi32>
    %c-2073298805_i32_44 = arith.constant -2073298805 : i32
    %115 = vector.broadcast %c-2073298805_i32_44 : i32 to vector<16x8xi32>
    %116 = arith.muli %114, %115 : vector<16x8xi32>
    %c16_i32_45 = arith.constant 16 : i32
    %117 = vector.broadcast %c16_i32_45 : i32 to vector<16x8xi32>
    %118 = arith.shrsi %116, %117 : vector<16x8xi32>
    %c65535_i32_46 = arith.constant 65535 : i32
    %119 = vector.broadcast %c65535_i32_46 : i32 to vector<16x8xi32>
    %120 = arith.andi %118, %119 : vector<16x8xi32>
    %121 = arith.xori %116, %120 : vector<16x8xi32>
    %c8_i32_47 = arith.constant 8 : i32
    %122 = vector.broadcast %c8_i32_47 : i32 to vector<16x8xi32>
    %123 = arith.shrsi %121, %122 : vector<16x8xi32>
    %c16777215_i32_48 = arith.constant 16777215 : i32
    %124 = vector.broadcast %c16777215_i32_48 : i32 to vector<16x8xi32>
    %125 = arith.andi %123, %124 : vector<16x8xi32>
    %c13421773_i32_49 = arith.constant 13421773 : i32
    %126 = vector.broadcast %c13421773_i32_49 : i32 to vector<16x8xi32>
    %127 = arith.cmpi slt, %125, %126 : vector<16x8xi32>
    %cst_50 = arith.constant 1.250000e+00 : f32
    %128 = vector.broadcast %cst_50 : f32 to vector<16x8xf32>
    %129 = arith.mulf %88, %128 : vector<16x8xf32>
    %cst_51 = arith.constant 0.000000e+00 : f32
    %130 = vector.broadcast %cst_51 : f32 to vector<16x8xf32>
    %131 = arith.select %127, %129, %130 : vector<16x8xi1>, vector<16x8xf32>
    %c0_52 = arith.constant 0 : index
    %c0_53 = arith.constant 0 : index
    %132 = vector.load %arg10[%c0_52, %c0_53] : memref<8x16xf32, #tpu.memory_space<vmem>>, vector<8x16xf32>
    %cst_54 = arith.constant dense<0.000000e+00> : vector<8x8xf32>
    %133 = tpu.matmul %132, %131, %cst_54 {dimension_numbers = #tpu.dot_dimension_numbers<[1], [0], [0], [1], [0, 0, 1, 1], [], []>} : vector<8x16xf32>, vector<16x8xf32>, vector<8x8xf32> -> vector<8x8xf32>
    %c0_55 = arith.constant 0 : index
    %c0_56 = arith.constant 0 : index
    %134 = vector.load %arg11[%c0_55, %c0_56] : memref<8x1xf32, #tpu.memory_space<vmem>>, vector<8x1xf32>
    %135 = vector.broadcast %134 : vector<8x1xf32> to vector<8x8xf32>
    %136 = arith.addf %133, %135 : vector<8x8xf32>
    %cst_57 = arith.constant 0.000000e+00 : f32
    %137 = vector.broadcast %cst_57 : f32 to vector<8x8xf32>
    %138 = arith.cmpf ogt, %136, %137 : vector<8x8xf32>
    %cst_58 = arith.constant 0.000000e+00 : f32
    %139 = vector.broadcast %cst_58 : f32 to vector<8x8xf32>
    %140 = arith.minimumf %136, %139 : vector<8x8xf32>
    %141 = math.exp %140 : vector<8x8xf32>
    %cst_59 = arith.constant 1.000000e+00 : f32
    %142 = vector.broadcast %cst_59 : f32 to vector<8x8xf32>
    %143 = arith.subf %141, %142 : vector<8x8xf32>
    %144 = arith.select %138, %136, %143 : vector<8x8xi1>, vector<8x8xf32>
    %c1000003_i32_60 = arith.constant 1000003 : i32
    %145 = arith.muli %0, %c1000003_i32_60 : i32
    %c1_i32_61 = arith.constant 1 : i32
    %146 = arith.addi %arg0, %c1_i32_61 : i32
    %c83492791_i32_62 = arith.constant 83492791 : i32
    %147 = arith.muli %146, %c83492791_i32_62 : i32
    %148 = arith.addi %145, %147 : i32
    %c3000009_i32 = arith.constant 3000009 : i32
    %149 = arith.xori %148, %c3000009_i32 : i32
    %150 = tpu.iota {dimensions = array<i32: 0>} : vector<8x8xi32>
    %151 = tpu.iota {dimensions = array<i32: 1>} : vector<8x8xi32>
    %c-1640531535_i32_63 = arith.constant -1640531535 : i32
    %152 = vector.broadcast %c-1640531535_i32_63 : i32 to vector<8x8xi32>
    %153 = arith.muli %150, %152 : vector<8x8xi32>
    %c-2048144777_i32_64 = arith.constant -2048144777 : i32
    %154 = vector.broadcast %c-2048144777_i32_64 : i32 to vector<8x8xi32>
    %155 = arith.muli %151, %154 : vector<8x8xi32>
    %156 = arith.xori %153, %155 : vector<8x8xi32>
    %157 = vector.broadcast %149 : i32 to vector<8x8xi32>
    %158 = arith.xori %156, %157 : vector<8x8xi32>
    %c16_i32_65 = arith.constant 16 : i32
    %159 = vector.broadcast %c16_i32_65 : i32 to vector<8x8xi32>
    %160 = arith.shrsi %158, %159 : vector<8x8xi32>
    %c65535_i32_66 = arith.constant 65535 : i32
    %161 = vector.broadcast %c65535_i32_66 : i32 to vector<8x8xi32>
    %162 = arith.andi %160, %161 : vector<8x8xi32>
    %163 = arith.xori %158, %162 : vector<8x8xi32>
    %c2146121005_i32_67 = arith.constant 2146121005 : i32
    %164 = vector.broadcast %c2146121005_i32_67 : i32 to vector<8x8xi32>
    %165 = arith.muli %163, %164 : vector<8x8xi32>
    %c15_i32_68 = arith.constant 15 : i32
    %166 = vector.broadcast %c15_i32_68 : i32 to vector<8x8xi32>
    %167 = arith.shrsi %165, %166 : vector<8x8xi32>
    %c131071_i32_69 = arith.constant 131071 : i32
    %168 = vector.broadcast %c131071_i32_69 : i32 to vector<8x8xi32>
    %169 = arith.andi %167, %168 : vector<8x8xi32>
    %170 = arith.xori %165, %169 : vector<8x8xi32>
    %c-2073298805_i32_70 = arith.constant -2073298805 : i32
    %171 = vector.broadcast %c-2073298805_i32_70 : i32 to vector<8x8xi32>
    %172 = arith.muli %170, %171 : vector<8x8xi32>
    %c16_i32_71 = arith.constant 16 : i32
    %173 = vector.broadcast %c16_i32_71 : i32 to vector<8x8xi32>
    %174 = arith.shrsi %172, %173 : vector<8x8xi32>
    %c65535_i32_72 = arith.constant 65535 : i32
    %175 = vector.broadcast %c65535_i32_72 : i32 to vector<8x8xi32>
    %176 = arith.andi %174, %175 : vector<8x8xi32>
    %177 = arith.xori %172, %176 : vector<8x8xi32>
    %c8_i32_73 = arith.constant 8 : i32
    %178 = vector.broadcast %c8_i32_73 : i32 to vector<8x8xi32>
    %179 = arith.shrsi %177, %178 : vector<8x8xi32>
    %c16777215_i32_74 = arith.constant 16777215 : i32
    %180 = vector.broadcast %c16777215_i32_74 : i32 to vector<8x8xi32>
    %181 = arith.andi %179, %180 : vector<8x8xi32>
    %c13421773_i32_75 = arith.constant 13421773 : i32
    %182 = vector.broadcast %c13421773_i32_75 : i32 to vector<8x8xi32>
    %183 = arith.cmpi slt, %181, %182 : vector<8x8xi32>
    %cst_76 = arith.constant 1.250000e+00 : f32
    %184 = vector.broadcast %cst_76 : f32 to vector<8x8xf32>
    %185 = arith.mulf %144, %184 : vector<8x8xf32>
    %cst_77 = arith.constant 0.000000e+00 : f32
    %186 = vector.broadcast %cst_77 : f32 to vector<8x8xf32>
    %187 = arith.select %183, %185, %186 : vector<8x8xi1>, vector<8x8xf32>
    %c0_78 = arith.constant 0 : index
    %c0_79 = arith.constant 0 : index
    %188 = vector.load %arg12[%c0_78, %c0_79] : memref<8x1xf32, #tpu.memory_space<vmem>>, vector<8x1xf32>
    %189 = vector.broadcast %188 : vector<8x1xf32> to vector<8x8xf32>
    %190 = arith.mulf %187, %189 : vector<8x8xf32>
    %cst_80 = arith.constant dense<0.000000e+00> : vector<8xf32>
    %191 = vector.multi_reduction <add>, %190, %cst_80 [0] : vector<8x8xf32> to vector<8xf32>
    %192 = vector.shape_cast %191 : vector<8xf32> to vector<1x8xf32>
    %c0_81 = arith.constant 0 : index
    %c0_82 = arith.constant 0 : index
    %193 = vector.load %arg13[%c0_81, %c0_82] : memref<1x1xf32, #tpu.memory_space<vmem>>, vector<1x1xf32>
    %194 = vector.broadcast %193 : vector<1x1xf32> to vector<1x8xf32>
    %195 = arith.addf %192, %194 : vector<1x8xf32>
    %c0_83 = arith.constant 0 : index
    %c0_84 = arith.constant 0 : index
    %196 = vector.load %arg14[%c0_83, %c0_84] : memref<1x8xf32, #tpu.memory_space<vmem>>, vector<1x8xf32>
    tpu.vector_store %arg14[%c0_83, %c0_84], %195 {strides = array<i32>} : memref<1x8xf32, #tpu.memory_space<vmem>>, vector<1x8xf32>,
    return
  }
  func.func @transform_0(%arg0: i32) -> i32 {
    %c0_i32 = arith.constant 0 : i32
    %c0_i32_0 = arith.constant 0 : i32
    return %c0_i32 : i32
  }
  func.func @transform_1(%arg0: i32) -> (i32, i32) {
    %c0_i32 = arith.constant 0 : i32
    %c0_i32_0 = arith.constant 0 : i32
    return %c0_i32, %arg0 : i32, i32
  }
  func.func @transform_2(%arg0: i32) -> (i32, i32) {
    %c0_i32 = arith.constant 0 : i32
    %c0_i32_0 = arith.constant 0 : i32
    return %c0_i32, %arg0 : i32, i32
  }
  func.func @transform_3(%arg0: i32) -> (i32, i32) {
    %c0_i32 = arith.constant 0 : i32
    %c0_i32_0 = arith.constant 0 : i32
    %c0_i32_1 = arith.constant 0 : i32
    return %c0_i32, %c0_i32_0 : i32, i32
  }
  func.func @transform_4(%arg0: i32) -> (i32, i32) {
    %c0_i32 = arith.constant 0 : i32
    %c0_i32_0 = arith.constant 0 : i32
    %c0_i32_1 = arith.constant 0 : i32
    return %c0_i32, %c0_i32_0 : i32, i32
  }
  func.func @transform_5(%arg0: i32) -> (i32, i32) {
    %c0_i32 = arith.constant 0 : i32
    %c0_i32_0 = arith.constant 0 : i32
    %c0_i32_1 = arith.constant 0 : i32
    return %c0_i32, %c0_i32_0 : i32, i32
  }
  func.func @transform_6(%arg0: i32) -> (i32, i32) {
    %c0_i32 = arith.constant 0 : i32
    %c0_i32_0 = arith.constant 0 : i32
    %c0_i32_1 = arith.constant 0 : i32
    return %c0_i32, %c0_i32_0 : i32, i32
  }
  func.func @transform_7(%arg0: i32) -> (i32, i32) {
    %c0_i32 = arith.constant 0 : i32
    %c0_i32_0 = arith.constant 0 : i32
    %c0_i32_1 = arith.constant 0 : i32
    return %c0_i32, %c0_i32_0 : i32, i32
  }
  func.func @transform_8(%arg0: i32) -> (i32, i32) {
    %c0_i32 = arith.constant 0 : i32
    %c0_i32_0 = arith.constant 0 : i32
    %c0_i32_1 = arith.constant 0 : i32
    return %c0_i32, %c0_i32_0 : i32, i32
  }
  func.func @transform_9(%arg0: i32) -> (i32, i32) {
    %c0_i32 = arith.constant 0 : i32
    %c0_i32_0 = arith.constant 0 : i32
    %c0_i32_1 = arith.constant 0 : i32
    return %c0_i32, %c0_i32_0 : i32, i32
  }
  func.func @transform_10(%arg0: i32) -> (i32, i32) {
    %c0_i32 = arith.constant 0 : i32
    %c0_i32_0 = arith.constant 0 : i32
    %c0_i32_1 = arith.constant 0 : i32
    return %c0_i32, %c0_i32_0 : i32, i32
  }
  func.func @transform_11(%arg0: i32) -> (i32, i32) {
    %c0_i32 = arith.constant 0 : i32
    %c0_i32_0 = arith.constant 0 : i32
    %c0_i32_1 = arith.constant 0 : i32
    return %c0_i32, %c0_i32_0 : i32, i32
  }
  func.func @transform_12(%arg0: i32) -> (i32, i32) {
    %c0_i32 = arith.constant 0 : i32
    %c0_i32_0 = arith.constant 0 : i32
    %c0_i32_1 = arith.constant 0 : i32
    return %c0_i32, %c0_i32_0 : i32, i32
  }
  func.func @transform_13(%arg0: i32) -> (i32, i32) {
    %c0_i32 = arith.constant 0 : i32
    %c0_i32_0 = arith.constant 0 : i32
    return %c0_i32, %arg0 : i32, i32
  }
}

</mosaic_0001>

<llo_original>
// kernel: tpu_custom_call.1
$region0: #{tpu_custom_call.1}
  #allocation0 [shape = 'u32[]', space=smem, size = 0x4, offset = 0x4, fixed_abs, tag = 'smem constant byte address 0x4 - core index']
  #allocation1 [shape = 'u32[144,128]{1,0:T(1,128)}', space=vmem, size = 0x12000, scoped, tag = 'internal scratch']
  #allocation2 [shape = 's32[1]{0:T(128)S(6)}', space=smem, size = 0x200, scoped, tag = 'scoped memory for tpu_custom_call.1']
  #allocation3 [shape = 'f32[1,1]{1,0:T(1,128)S(1)}', space=vmem, size = 0x200, scoped, tag = 'scoped memory for tpu_custom_call.1']
  %s0 = inlined_call_operand.<no memory space> [shape: s32[1], index: 0, kind: input, shape index: {}]
  %s1 = inlined_call_operand.hbm [shape: s32[1,8], index: 1, kind: input, shape index: {}]
  %s2 = inlined_call_operand.hbm [shape: s32[1,8], index: 2, kind: input, shape index: {}]
  %s3 = inlined_call_operand.vmem [shape: f32[16,32], index: 3, kind: input, shape index: {}]
  %s4 = inlined_call_operand.vmem [shape: f32[16,48], index: 4, kind: input, shape index: {}]
  %s5 = inlined_call_operand.vmem [shape: f32[32,32], index: 5, kind: input, shape index: {}]
  %s6 = inlined_call_operand.vmem [shape: f32[32,1], index: 6, kind: input, shape index: {}]
  %s7 = inlined_call_operand.vmem [shape: f32[16,32], index: 7, kind: input, shape index: {}]
  %s8 = inlined_call_operand.vmem [shape: f32[16,1], index: 8, kind: input, shape index: {}]
  %s9 = inlined_call_operand.hbm [shape: f32[8,16], index: 9, kind: input, shape index: {}]
  %s10 = inlined_call_operand.vmem [shape: f32[8,1], index: 10, kind: input, shape index: {}]
  %s11 = inlined_call_operand.vmem [shape: f32[8,1], index: 11, kind: input, shape index: {}]
  %s12 = inlined_call_operand.<no memory space> [shape: f32[1,1], index: 12, kind: input, shape index: {}]
  %s13 = inlined_call_operand.hbm [shape: f32[1,8], index: 13, kind: output, shape index: {}]
  %s14 = sld [smem:[#allocation0]]
  $region74: #{tpu_custom_call.1} parent=0
    _
  %s16 = ssub.s32 1, %s14
  %s17 = scalar_select 0, %s16, %s14
  %18 = sst [smem:[#allocation2]] %s0
  %v19 = vstv %s12
  %20 = vst [vmem:[#allocation3] sm:$0x1] %v19
  $region1: #{tpu_custom_call.1} parent=0
    #allocation4 [shape = 'u8[512]{0}', space=vmem, size = 0x400, scoped, tag = 'input window, operand 1, single buffered']
    #allocation5 [shape = 's32[1]{0}', space=sflag, size = 0x4, scoped, tag = 'scoped memory for tpu_custom_call.1']
    #allocation6 [shape = 's32[1]{0}', space=sflag, size = 0x4, scoped, tag = 'scoped memory for tpu_custom_call.1']
    #allocation7 [shape = 'u8[512]{0}', space=vmem, size = 0x400, scoped, tag = 'input window, operand 2, single buffered']
    #allocation8 [shape = 's32[1]{0}', space=sflag, size = 0x4, scoped, tag = 'scoped memory for tpu_custom_call.1']
    #allocation9 [shape = 'u8[4096]{0}', space=vmem, size = 0x1000, scoped, tag = 'input window, operand 9, single buffered']
    #allocation10 [shape = 'u8[512]{0}', space=vmem, size = 0x400, scoped, tag = 'output window, operand 0, single buffered']
    %21 = vsyncpa [#allocation5], 0
    %22 = vsyncpa [#allocation8], 0
    %23 = vsyncpa [#allocation6], 0
    // Predicated region
    $region2: #{tpu_custom_call.1} parent=1 // pred_check
      _
    $region3: #{tpu_custom_call.1} parent=1 // pred_check_branch
      %25 = sbr.rel (0) target = $region5
    $region4: #{tpu_custom_call.1} parent=1 // pred_region
      _
    $region5: #{tpu_custom_call.1} parent=1 // pred_fallthru
      _
    // Predicated region
    $region6: #{tpu_custom_call.1} parent=1 // pred_check
      _
    $region7: #{tpu_custom_call.1} parent=1 // pred_check_branch
      %27 = sbr.rel (0) target = $region9
    $region8: #{tpu_custom_call.1} parent=1 // pred_region
      %s29 = ssub.s32 16, 16
      %30 = vsyncadd [#allocation5], %s29
      %s32 = sshll.u32 [#allocation4], 4
      %s33 = int_to_ptr.vmem [resolvable:$true] %s32
      %35 = dma.hbm_to_vmem [thread:$0]  %s1, 16, %s33, [#allocation5]
    $region9: #{tpu_custom_call.1} parent=1 // pred_fallthru
      _
    // Predicated region
    $region10: #{tpu_custom_call.1} parent=1 // pred_check
      _
    $region11: #{tpu_custom_call.1} parent=1 // pred_check_branch
      %37 = sbr.rel (0) target = $region13
    $region12: #{tpu_custom_call.1} parent=1 // pred_region
      %s39 = ssub.s32 16, 16
      %40 = vsyncadd [#allocation8], %s39
      %s42 = sshll.u32 [#allocation7], 4
      %s43 = int_to_ptr.vmem [resolvable:$true] %s42
      %45 = dma.hbm_to_vmem [thread:$0]  %s2, 16, %s43, [#allocation8]
    $region13: #{tpu_custom_call.1} parent=1 // pred_fallthru
      _
    // Predicated region
    $region14: #{tpu_custom_call.1} parent=1 // pred_check
      _
    $region15: #{tpu_custom_call.1} parent=1 // pred_check_branch
      %47 = sbr.rel (0) target = $region17
    $region16: #{tpu_custom_call.1} parent=1 // pred_region
      _
    $region17: #{tpu_custom_call.1} parent=1 // pred_fallthru
      _
    // Predicated region
    $region18: #{tpu_custom_call.1} parent=1 // pred_check
      _
    $region19: #{tpu_custom_call.1} parent=1 // pred_check_branch
      %49 = sbr.rel (0) target = $region21
    $region20: #{tpu_custom_call.1} parent=1 // pred_region
      _
    $region21: #{tpu_custom_call.1} parent=1 // pred_fallthru
      _
    // Predicated region
    $region22: #{tpu_custom_call.1} parent=1 // pred_check
      _
    $region23: #{tpu_custom_call.1} parent=1 // pred_check_branch
      %51 = sbr.rel (0) target = $region25
    $region24: #{tpu_custom_call.1} parent=1 // pred_region
      _
    $region25: #{tpu_custom_call.1} parent=1 // pred_fallthru
      _
    // Predicated region
    $region26: #{tpu_custom_call.1} parent=1 // pred_check
      _
    $region27: #{tpu_custom_call.1} parent=1 // pred_check_branch
      %53 = sbr.rel (0) target = $region29
    $region28: #{tpu_custom_call.1} parent=1 // pred_region
      _
    $region29: #{tpu_custom_call.1} parent=1 // pred_fallthru
      _
    // Predicated region
    $region30: #{tpu_custom_call.1} parent=1 // pred_check
      _
    $region31: #{tpu_custom_call.1} parent=1 // pred_check_branch
      %55 = sbr.rel (0) target = $region33
    $region32: #{tpu_custom_call.1} parent=1 // pred_region
      _
    $region33: #{tpu_custom_call.1} parent=1 // pred_fallthru
      _
    // Predicated region
    $region34: #{tpu_custom_call.1} parent=1 // pred_check
      _
    $region35: #{tpu_custom_call.1} parent=1 // pred_check_branch
      %57 = sbr.rel (0) target = $region37
    $region36: #{tpu_custom_call.1} parent=1 // pred_region
      _
    $region37: #{tpu_custom_call.1} parent=1 // pred_fallthru
      _
    // Predicated region
    $region38: #{tpu_custom_call.1} parent=1 // pred_check
      _
    $region39: #{tpu_custom_call.1} parent=1 // pred_check_branch
      %59 = sbr.rel (0) target = $region41
    $region40: #{tpu_custom_call.1} parent=1 // pred_region
      %s61 = ssub.s32 128, 128
      %62 = vsyncadd [#allocation8], %s61
      %s64 = sshll.u32 [#allocation9], 4
      %s65 = int_to_ptr.vmem [resolvable:$true] %s64
      %67 = dma.hbm_to_vmem [thread:$0]  %s9, 128, %s65, [#allocation8]
    $region41: #{tpu_custom_call.1} parent=1 // pred_fallthru
      _
    // Predicated region
    $region42: #{tpu_custom_call.1} parent=1 // pred_check
      _
    $region43: #{tpu_custom_call.1} parent=1 // pred_check_branch
      %69 = sbr.rel (0) target = $region45
    $region44: #{tpu_custom_call.1} parent=1 // pred_region
      _
    $region45: #{tpu_custom_call.1} parent=1 // pred_fallthru
      _
    // Predicated region
    $region46: #{tpu_custom_call.1} parent=1 // pred_check
      _
    $region47: #{tpu_custom_call.1} parent=1 // pred_check_branch
      %71 = sbr.rel (0) target = $region49
    $region48: #{tpu_custom_call.1} parent=1 // pred_region
      _
    $region49: #{tpu_custom_call.1} parent=1 // pred_fallthru
      _
    // Predicated region
    $region50: #{tpu_custom_call.1} parent=1 // pred_check
      _
    $region51: #{tpu_custom_call.1} parent=1 // pred_check_branch
      %73 = sbr.rel (0) target = $region53
    $region52: #{tpu_custom_call.1} parent=1 // pred_region
      _
    $region53: #{tpu_custom_call.1} parent=1 // pred_fallthru
      _
    // Predicated region
    $region54: #{tpu_custom_call.1} parent=1 // pred_check
      _
    $region55: #{tpu_custom_call.1} parent=1 // pred_check_branch
      %75 = sbr.rel (0) target = $region57
    $region56: #{tpu_custom_call.1} parent=1 // pred_region
      %76 = dma.done [#allocation5], 16
    $region57: #{tpu_custom_call.1} parent=1 // pred_fallthru
      _
    // Predicated region
    $region58: #{tpu_custom_call.1} parent=1 // pred_check
      _
    $region59: #{tpu_custom_call.1} parent=1 // pred_check_branch
      %78 = sbr.rel (0) target = $region61
    $region60: #{tpu_custom_call.1} parent=1 // pred_region
      %79 = dma.done [#allocation8], 16
    $region61: #{tpu_custom_call.1} parent=1 // pred_fallthru
      _
    // Predicated region
    $region62: #{tpu_custom_call.1} parent=1 // pred_check
      _
    $region63: #{tpu_custom_call.1} parent=1 // pred_check_branch
      %81 = sbr.rel (0) target = $region65
    $region64: #{tpu_custom_call.1} parent=1 // pred_region
      %82 = dma.done [#allocation8], 128
    $region65: #{tpu_custom_call.1} parent=1 // pred_fallthru
      _
    %s83 = sld [smem:[#allocation2]]
    %v84 = vld [vmem:[#allocation4] sm:$0x1]
    %v85 = vld [vmem:[#allocation7] sm:$0x1]
    %v86 = vlaneseq
    %v87 = vshrl.u32 %v86, 7
    %v88 = vadd.s32 %v87, 8
    %v89 = vadd.s32 %v87, 16
    %v90 = vadd.s32 %v87, 24
    %v91 = vadd.s32 %v87, 32
    %v92 = vadd.s32 %v87, 40
    %v93 = vlaneseq
    %v94 = vshrl.u32 %v93, 7
    %v95 = vsub.s32 0, %v94
    %v96 = vrot.slane %v84, %v95
    %vm97 = vcmp.eq.s32.totalorder %v87, %v96
    %vm98 = vcmp.eq.s32.totalorder %v88, %v96
    %vm99 = vcmp.eq.s32.totalorder %v89, %v96
    %vm100 = vcmp.eq.s32.totalorder %v90, %v96
    %v101 = vsel %vm97, 1.0, 0.0
    %v102 = vsel %vm98, 1.0, 0.0
    %v103 = vsel %vm99, 1.0, 0.0
    %v104 = vsel %vm100, 1.0, 0.0
    %v105 = vlaneseq
    %v106 = vshrl.u32 %v105, 7
    %v107 = vsub.s32 0, %v106
    %v108 = vrot.slane %v85, %v107
    %vm109 = vcmp.eq.s32.totalorder %v87, %v108
    %vm110 = vcmp.eq.s32.totalorder %v88, %v108
    %vm111 = vcmp.eq.s32.totalorder %v89, %v108
    %vm112 = vcmp.eq.s32.totalorder %v90, %v108
    %vm113 = vcmp.eq.s32.totalorder %v91, %v108
    %vm114 = vcmp.eq.s32.totalorder %v92, %v108
    %v115 = vsel %vm109, 1.0, 0.0
    %v116 = vsel %vm110, 1.0, 0.0
    %v117 = vsel %vm111, 1.0, 0.0
    %v118 = vsel %vm112, 1.0, 0.0
    %v119 = vsel %vm113, 1.0, 0.0
    %v120 = vsel %vm114, 1.0, 0.0
    %v121 = vld [vmem:[%s3] sm:$0xff]
    %v122 = vld [vmem:[%s3 + $0x8] sm:$0xff]
    %vm123 = vcmask 261120
    %v125 = vsel %vm123, %v121, 0
    %v128 = vsel %vm123, %v122, 0
    %130 = vmatprep.subr.mxu0 0.0
    %131 = vmatpush1.msra.mxu0 0.0
    %132 = vmatprep.subr.mxu0 0.0
    %133 = vmatpush1.msra.mxu0 0.0
    %134 = vmatprep.subr.mxu0 0.0
    %135 = vmatpush1.msra.mxu0 0.0
    %136 = vmatprep.subr.mxu0 0.0
    %137 = vmatpush1.msra.mxu0 0.0
    %138 = vmatprep.subr.mxu0 0.0
    %139 = vmatpush1.msra.mxu0 0.0
    %140 = vmatprep.subr.mxu0 0.0
    %141 = vmatpush1.msra.mxu0 0.0
    %142 = vmatprep.subr.mxu0 0.0
    %143 = vmatpush1.msra.mxu0 0.0
    %144 = vmatprep.subr.mxu0 0.0
    %145 = vmatpush1.msra.mxu0 0.0
    %146 = vmatprep.subr.mxu0 0.0
    %147 = vmatpush1.msra.mxu0 0.0
    %148 = vmatprep.subr.mxu0 0.0
    %149 = vmatpush1.msra.mxu0 0.0
    %150 = vmatprep.subr.mxu0 0.0
    %151 = vmatpush1.msra.mxu0 0.0
    %152 = vmatprep.subr.mxu0 0.0
    %153 = vmatpush1.msra.mxu0 0.0
    %154 = vmatprep.subr.mxu0 0.0
    %155 = vmatpush1.msra.mxu0 %v104
    %156 = vmatprep.subr.mxu0 0.0
    %157 = vmatpush1.msra.mxu0 %v103
    %158 = vmatprep.subr.mxu0 0.0
    %159 = vmatpush1.msra.mxu0 %v102
    %160 = vmatprep.subr.mxu0 0.0
    %161 = vmatpush1.msra.mxu0 %v101
    %162 = vmatprep.subr.mxu0 0.0
    %163 = vmatpush2.msra.mxu0 0.0
    %164 = vmatprep.subr.mxu0 0.0
    %165 = vmatpush2.msra.mxu0 0.0
    %166 = vmatprep.subr.mxu0 0.0
    %167 = vmatpush2.msra.mxu0 0.0
    %168 = vmatprep.subr.mxu0 0.0
    %169 = vmatpush2.msra.mxu0 0.0
    %170 = vmatprep.subr.mxu0 0.0
    %171 = vmatpush2.msra.mxu0 0.0
    %172 = vmatprep.subr.mxu0 0.0
    %173 = vmatpush2.msra.mxu0 0.0
    %174 = vmatprep.subr.mxu0 0.0
    %175 = vmatpush2.msra.mxu0 0.0
    %176 = vmatprep.subr.mxu0 0.0
    %177 = vmatpush2.msra.mxu0 0.0
    %178 = vmatprep.subr.mxu0 0.0
    %179 = vmatpush2.msra.mxu0 0.0
    %180 = vmatprep.subr.mxu0 0.0
    %181 = vmatpush2.msra.mxu0 0.0
    %182 = vmatprep.subr.mxu0 0.0
    %183 = vmatpush2.msra.mxu0 0.0
    %184 = vmatprep.subr.mxu0 0.0
    %185 = vmatpush2.msra.mxu0 0.0
    %186 = vmatprep.subr.mxu0 0.0
    %187 = vmatpush2.msra.mxu0 0.0
    %188 = vmatprep.subr.mxu0 0.0
    %189 = vmatpush2.msra.mxu0 0.0
    %190 = vmatprep.subr.mxu0 0.0
    %191 = vmatpush2.msra.mxu0 0.0
    %192 = vmatprep.subr.mxu0 0.0
    %193 = vmatpush2.msra.mxu0 0.0
    %194 = vmatprep.mubr.f32.mxu0 0.0
    %195 = vmatmul.mubr.f32.gmra.mxu0 %v125
    %v196 = vpop.f32.mrf.mxu0
    %v197 = vadd.f32 0.0, %v196
    %v198 = vpop.f32.mrf.mxu0
    %199 = vmatprep.mubr.f32.mxu0 0.0
    %200 = vmatmul.mubr.f32.gmra.mxu0 %v128
    %v201 = vpop.f32.mrf.mxu0
    %v202 = vadd.f32 0.0, %v201
    %v203 = vpop.f32.mrf.mxu0
    %204 = vdwg.mxu0
    %v205 = vld [vmem:[%s4] sm:$0xff]
    %v206 = vld [vmem:[%s4 + $0x8] sm:$0xff]
    %vm207 = vcmask 392192
    %v209 = vsel %vm207, %v205, 0
    %v212 = vsel %vm207, %v206, 0
    %214 = vmatprep.subr.mxu0 0.0
    %215 = vmatpush1.msra.mxu0 0.0
    %216 = vmatprep.subr.mxu0 0.0
    %217 = vmatpush1.msra.mxu0 0.0
    %218 = vmatprep.subr.mxu0 0.0
    %219 = vmatpush1.msra.mxu0 0.0
    %220 = vmatprep.subr.mxu0 0.0
    %221 = vmatpush1.msra.mxu0 0.0
    %222 = vmatprep.subr.mxu0 0.0
    %223 = vmatpush1.msra.mxu0 0.0
    %224 = vmatprep.subr.mxu0 0.0
    %225 = vmatpush1.msra.mxu0 0.0
    %226 = vmatprep.subr.mxu0 0.0
    %227 = vmatpush1.msra.mxu0 0.0
    %228 = vmatprep.subr.mxu0 0.0
    %229 = vmatpush1.msra.mxu0 0.0
    %230 = vmatprep.subr.mxu0 0.0
    %231 = vmatpush1.msra.mxu0 0.0
    %232 = vmatprep.subr.mxu0 0.0
    %233 = vmatpush1.msra.mxu0 0.0
    %234 = vmatprep.subr.mxu0 0.0
    %235 = vmatpush1.msra.mxu0 %v120
    %236 = vmatprep.subr.mxu0 0.0
    %237 = vmatpush1.msra.mxu0 %v119
    %238 = vmatprep.subr.mxu0 0.0
    %239 = vmatpush1.msra.mxu0 %v118
    %240 = vmatprep.subr.mxu0 0.0
    %241 = vmatpush1.msra.mxu0 %v117
    %242 = vmatprep.subr.mxu0 0.0
    %243 = vmatpush1.msra.mxu0 %v116
    %244 = vmatprep.subr.mxu0 0.0
    %245 = vmatpush1.msra.mxu0 %v115
    %246 = vmatprep.subr.mxu0 0.0
    %247 = vmatpush2.msra.mxu0 0.0
    %248 = vmatprep.subr.mxu0 0.0
    %249 = vmatpush2.msra.mxu0 0.0
    %250 = vmatprep.subr.mxu0 0.0
    %251 = vmatpush2.msra.mxu0 0.0
    %252 = vmatprep.subr.mxu0 0.0
    %253 = vmatpush2.msra.mxu0 0.0
    %254 = vmatprep.subr.mxu0 0.0
    %255 = vmatpush2.msra.mxu0 0.0
    %256 = vmatprep.subr.mxu0 0.0
    %257 = vmatpush2.msra.mxu0 0.0
    %258 = vmatprep.subr.mxu0 0.0
    %259 = vmatpush2.msra.mxu0 0.0
    %260 = vmatprep.subr.mxu0 0.0
    %261 = vmatpush2.msra.mxu0 0.0
    %262 = vmatprep.subr.mxu0 0.0
    %263 = vmatpush2.msra.mxu0 0.0
    %264 = vmatprep.subr.mxu0 0.0
    %265 = vmatpush2.msra.mxu0 0.0
    %266 = vmatprep.subr.mxu0 0.0
    %267 = vmatpush2.msra.mxu0 0.0
    %268 = vmatprep.subr.mxu0 0.0
    %269 = vmatpush2.msra.mxu0 0.0
    %270 = vmatprep.subr.mxu0 0.0
    %271 = vmatpush2.msra.mxu0 0.0
    %272 = vmatprep.subr.mxu0 0.0
    %273 = vmatpush2.msra.mxu0 0.0
    %274 = vmatprep.subr.mxu0 0.0
    %275 = vmatpush2.msra.mxu0 0.0
    %276 = vmatprep.subr.mxu0 0.0
    %277 = vmatpush2.msra.mxu0 0.0
    %278 = vmatprep.mubr.f32.mxu0 0.0
    %279 = vmatmul.mubr.f32.gmra.mxu0 %v209
    %v280 = vpop.f32.mrf.mxu0
    %v281 = vadd.f32 0.0, %v280
    %v282 = vpop.f32.mrf.mxu0
    %283 = vmatprep.mubr.f32.mxu0 0.0
    %284 = vmatmul.mubr.f32.gmra.mxu0 %v212
    %v285 = vpop.f32.mrf.mxu0
    %v286 = vadd.f32 0.0, %v285
    %v287 = vpop.f32.mrf.mxu0
    %288 = vdwg.mxu0
    %v289 = vld [vmem:[%s5] sm:$0xff]
    %v290 = vld [vmem:[%s5 + $0x8] sm:$0xff]
    %v291 = vld [vmem:[%s5 + $0x10] sm:$0xff]
    %v292 = vld [vmem:[%s5 + $0x18] sm:$0xff]
    %v293 = vld [vmem:[%s6] sm:$0xff]
    %v294 = vld [vmem:[%s6 + $0x8] sm:$0xff]
    %v295 = vld [vmem:[%s6 + $0x10] sm:$0xff]
    %v296 = vld [vmem:[%s6 + $0x18] sm:$0xff]
    %298 = vset.pattern.permute.xlu0 0
    %299 = vperm.xlu0 %298, %v293
    %v300 = vpop.permute.xlu0 %299
    %303 = vset.pattern.permute.xlu0 0
    %304 = vperm.xlu0 %303, %v294
    %v305 = vpop.permute.xlu0 %304
    %308 = vset.pattern.permute.xlu0 0
    %309 = vperm.xlu0 %308, %v295
    %v310 = vpop.permute.xlu0 %309
    %313 = vset.pattern.permute.xlu0 0
    %314 = vperm.xlu0 %313, %v296
    %v315 = vpop.permute.xlu0 %314
    %v318 = vsel %vm123, %v289, 0
    %v321 = vsel %vm123, %v290, 0
    %v324 = vsel %vm123, %v291, 0
    %v327 = vsel %vm123, %v292, 0
    %329 = vmatprep.subr.mxu0 0.0
    %330 = vmatpush1.msra.mxu0 0.0
    %331 = vmatprep.subr.mxu0 0.0
    %332 = vmatpush1.msra.mxu0 0.0
    %333 = vmatprep.subr.mxu0 0.0
    %334 = vmatpush1.msra.mxu0 0.0
    %335 = vmatprep.subr.mxu0 0.0
    %336 = vmatpush1.msra.mxu0 0.0
    %337 = vmatprep.subr.mxu0 0.0
    %338 = vmatpush1.msra.mxu0 0.0
    %339 = vmatprep.subr.mxu0 0.0
    %340 = vmatpush1.msra.mxu0 0.0
    %341 = vmatprep.subr.mxu0 0.0
    %342 = vmatpush1.msra.mxu0 0.0
    %343 = vmatprep.subr.mxu0 0.0
    %344 = vmatpush1.msra.mxu0 0.0
    %345 = vmatprep.subr.mxu0 0.0
    %346 = vmatpush1.msra.mxu0 0.0
    %347 = vmatprep.subr.mxu0 0.0
    %348 = vmatpush1.msra.mxu0 0.0
    %349 = vmatprep.subr.mxu0 0.0
    %350 = vmatpush1.msra.mxu0 0.0
    %351 = vmatprep.subr.mxu0 0.0
    %352 = vmatpush1.msra.mxu0 0.0
    %353 = vmatprep.subr.mxu0 0.0
    %354 = vmatpush1.msra.mxu0 %v286
    %355 = vmatprep.subr.mxu0 0.0
    %356 = vmatpush1.msra.mxu0 %v281
    %357 = vmatprep.subr.mxu0 0.0
    %358 = vmatpush1.msra.mxu0 %v202
    %359 = vmatprep.subr.mxu0 0.0
    %360 = vmatpush1.msra.mxu0 %v197
    %361 = vmatprep.subr.mxu0 0.0
    %362 = vmatpush2.msra.mxu0 0.0
    %363 = vmatprep.subr.mxu0 0.0
    %364 = vmatpush2.msra.mxu0 0.0
    %365 = vmatprep.subr.mxu0 0.0
    %366 = vmatpush2.msra.mxu0 0.0
    %367 = vmatprep.subr.mxu0 0.0
    %368 = vmatpush2.msra.mxu0 0.0
    %369 = vmatprep.subr.mxu0 0.0
    %370 = vmatpush2.msra.mxu0 0.0
    %371 = vmatprep.subr.mxu0 0.0
    %372 = vmatpush2.msra.mxu0 0.0
    %373 = vmatprep.subr.mxu0 0.0
    %374 = vmatpush2.msra.mxu0 0.0
    %375 = vmatprep.subr.mxu0 0.0
    %376 = vmatpush2.msra.mxu0 0.0
    %377 = vmatprep.subr.mxu0 0.0
    %378 = vmatpush2.msra.mxu0 0.0
    %379 = vmatprep.subr.mxu0 0.0
    %380 = vmatpush2.msra.mxu0 0.0
    %381 = vmatprep.subr.mxu0 0.0
    %382 = vmatpush2.msra.mxu0 0.0
    %383 = vmatprep.subr.mxu0 0.0
    %384 = vmatpush2.msra.mxu0 0.0
    %385 = vmatprep.subr.mxu0 0.0
    %386 = vmatpush2.msra.mxu0 0.0
    %387 = vmatprep.subr.mxu0 0.0
    %388 = vmatpush2.msra.mxu0 0.0
    %389 = vmatprep.subr.mxu0 0.0
    %390 = vmatpush2.msra.mxu0 0.0
    %391 = vmatprep.subr.mxu0 0.0
    %392 = vmatpush2.msra.mxu0 0.0
    %393 = vmatprep.mubr.f32.mxu0 0.0
    %394 = vmatmul.mubr.f32.gmra.mxu0 %v318
    %v395 = vpop.f32.mrf.mxu0
    %v396 = vadd.f32 %v300, %v395
    %v397 = vpop.f32.mrf.mxu0
    %398 = vmatprep.mubr.f32.mxu0 0.0
    %399 = vmatmul.mubr.f32.gmra.mxu0 %v321
    %v400 = vpop.f32.mrf.mxu0
    %v401 = vadd.f32 %v305, %v400
    %v402 = vpop.f32.mrf.mxu0
    %403 = vmatprep.mubr.f32.mxu0 0.0
    %404 = vmatmul.mubr.f32.gmra.mxu0 %v324
    %v405 = vpop.f32.mrf.mxu0
    %v406 = vadd.f32 %v310, %v405
    %v407 = vpop.f32.mrf.mxu0
    %408 = vmatprep.mubr.f32.mxu0 0.0
    %409 = vmatmul.mubr.f32.gmra.mxu0 %v327
    %v410 = vpop.f32.mrf.mxu0
    %v411 = vadd.f32 %v315, %v410
    %v412 = vpop.f32.mrf.mxu0
    %413 = vdwg.mxu0
    %vm414 = vcmp.gt.f32.partialorder %v396, 0.0
    %vm415 = vcmp.gt.f32.partialorder %v401, 0.0
    %vm416 = vcmp.gt.f32.partialorder %v406, 0.0
    %vm417 = vcmp.gt.f32.partialorder %v411, 0.0
    %v418 = vmin.f32 %v396, 0.0
    %v419 = vmin.f32 %v401, 0.0
    %v420 = vmin.f32 %v406, 0.0
    %v421 = vmin.f32 %v411, 0.0
    %v422 = vmul.f32 %v418, 1.442695
    %v423 = vpow.pop %v422
    %v424 = vmul.f32 %v419, 1.442695
    %v425 = vpow.pop %v424
    %v426 = vmul.f32 %v420, 1.442695
    %v427 = vpow.pop %v426
    %v428 = vmul.f32 %v421, 1.442695
    %v429 = vpow.pop %v428
    %v430 = vsub.f32 %v423, 1.0
    %v431 = vsub.f32 %v425, 1.0
    %v432 = vsub.f32 %v427, 1.0
    %v433 = vsub.f32 %v429, 1.0
    %v434 = vsel %vm414, %v396, %v430
    %v435 = vsel %vm415, %v401, %v431
    %v436 = vsel %vm416, %v406, %v432
    %v437 = vsel %vm417, %v411, %v433
    %s438 = smul.u32 %s83, 1000003
    %s439 = sadd.s32 0, 1
    %s440 = smul.u32 %s439, 83492791
    %s441 = sadd.s32 %s438, %s440
    %s442 = sxor.u32 %s441, 1000003
    %v443 = vlaneseq
    %v444 = vand.u32 %v443, 127
    %v445 = vmul.u32 %v87, 2654435761
    %v446 = vmul.u32 %v88, 2654435761
    %v447 = vmul.u32 %v89, 2654435761
    %v448 = vmul.u32 %v90, 2654435761
    %v449 = vmul.u32 %v444, 2246822519
    %v450 = vxor.u32 %v445, %v449
    %v451 = vxor.u32 %v446, %v449
    %v452 = vxor.u32 %v447, %v449
    %v453 = vxor.u32 %v448, %v449
    %v454 = vstv %s442
    %v455 = vxor.u32 %v450, %v454
    %v456 = vxor.u32 %v451, %v454
    %v457 = vxor.u32 %v452, %v454
    %v458 = vxor.u32 %v453, %v454
    %v459 = vshra.s32 %v455, 16
    %v460 = vshra.s32 %v456, 16
    %v461 = vshra.s32 %v457, 16
    %v462 = vshra.s32 %v458, 16
    %v463 = vand.u32 %v459, 65535
    %v464 = vand.u32 %v460, 65535
    %v465 = vand.u32 %v461, 65535
    %v466 = vand.u32 %v462, 65535
    %v467 = vxor.u32 %v455, %v463
    %v468 = vxor.u32 %v456, %v464
    %v469 = vxor.u32 %v457, %v465
    %v470 = vxor.u32 %v458, %v466
    %v471 = vmul.u32 %v467, 2146121005
    %v472 = vmul.u32 %v468, 2146121005
    %v473 = vmul.u32 %v469, 2146121005
    %v474 = vmul.u32 %v470, 2146121005
    %v475 = vshra.s32 %v471, 15
    %v476 = vshra.s32 %v472, 15
    %v477 = vshra.s32 %v473, 15
    %v478 = vshra.s32 %v474, 15
    %v479 = vand.u32 %v475, 131071
    %v480 = vand.u32 %v476, 131071
    %v481 = vand.u32 %v477, 131071
    %v482 = vand.u32 %v478, 131071
    %v483 = vxor.u32 %v471, %v479
    %v484 = vxor.u32 %v472, %v480
    %v485 = vxor.u32 %v473, %v481
    %v486 = vxor.u32 %v474, %v482
    %v487 = vmul.u32 %v483, 2221668491
    %v488 = vmul.u32 %v484, 2221668491
    %v489 = vmul.u32 %v485, 2221668491
    %v490 = vmul.u32 %v486, 2221668491
    %v491 = vshra.s32 %v487, 16
    %v492 = vshra.s32 %v488, 16
    %v493 = vshra.s32 %v489, 16
    %v494 = vshra.s32 %v490, 16
    %v495 = vand.u32 %v491, 65535
    %v496 = vand.u32 %v492, 65535
    %v497 = vand.u32 %v493, 65535
    %v498 = vand.u32 %v494, 65535
    %v499 = vxor.u32 %v487, %v495
    %v500 = vxor.u32 %v488, %v496
    %v501 = vxor.u32 %v489, %v497
    %v502 = vxor.u32 %v490, %v498
    %v503 = vshra.s32 %v499, 8
    %v504 = vshra.s32 %v500, 8
    %v505 = vshra.s32 %v501, 8
    %v506 = vshra.s32 %v502, 8
    %v507 = vand.u32 %v503, 16777215
    %v508 = vand.u32 %v504, 16777215
    %v509 = vand.u32 %v505, 16777215
    %v510 = vand.u32 %v506, 16777215
    %vm511 = vcmp.lt.s32.totalorder %v507, 13421773
    %vm512 = vcmp.lt.s32.totalorder %v508, 13421773
    %vm513 = vcmp.lt.s32.totalorder %v509, 13421773
    %vm514 = vcmp.lt.s32.totalorder %v510, 13421773
    %v515 = vmul.f32 %v434, 1.25
    %v516 = vmul.f32 %v435, 1.25
    %v517 = vmul.f32 %v436, 1.25
    %v518 = vmul.f32 %v437, 1.25
    %v519 = vsel %vm511, %v515, 0.0
    %v520 = vsel %vm512, %v516, 0.0
    %v521 = vsel %vm513, %v517, 0.0
    %v522 = vsel %vm514, %v518, 0.0
    %v523 = vld [vmem:[%s7] sm:$0xff]
    %v524 = vld [vmem:[%s7 + $0x8] sm:$0xff]
    %v525 = vld [vmem:[%s8] sm:$0xff]
    %v526 = vld [vmem:[%s8 + $0x8] sm:$0xff]
    %528 = vset.pattern.permute.xlu0 0
    %529 = vperm.xlu0 %528, %v525
    %v530 = vpop.permute.xlu0 %529
    %533 = vset.pattern.permute.xlu0 0
    %534 = vperm.xlu0 %533, %v526
    %v535 = vpop.permute.xlu0 %534
    %v538 = vsel %vm123, %v523, 0
    %v541 = vsel %vm123, %v524, 0
    %543 = vmatprep.subr.mxu0 0.0
    %544 = vmatpush1.msra.mxu0 0.0
    %545 = vmatprep.subr.mxu0 0.0
    %546 = vmatpush1.msra.mxu0 0.0
    %547 = vmatprep.subr.mxu0 0.0
    %548 = vmatpush1.msra.mxu0 0.0
    %549 = vmatprep.subr.mxu0 0.0
    %550 = vmatpush1.msra.mxu0 0.0
    %551 = vmatprep.subr.mxu0 0.0
    %552 = vmatpush1.msra.mxu0 0.0
    %553 = vmatprep.subr.mxu0 0.0
    %554 = vmatpush1.msra.mxu0 0.0
    %555 = vmatprep.subr.mxu0 0.0
    %556 = vmatpush1.msra.mxu0 0.0
    %557 = vmatprep.subr.mxu0 0.0
    %558 = vmatpush1.msra.mxu0 0.0
    %559 = vmatprep.subr.mxu0 0.0
    %560 = vmatpush1.msra.mxu0 0.0
    %561 = vmatprep.subr.mxu0 0.0
    %562 = vmatpush1.msra.mxu0 0.0
    %563 = vmatprep.subr.mxu0 0.0
    %564 = vmatpush1.msra.mxu0 0.0
    %565 = vmatprep.subr.mxu0 0.0
    %566 = vmatpush1.msra.mxu0 0.0
    %567 = vmatprep.subr.mxu0 0.0
    %568 = vmatpush1.msra.mxu0 %v522
    %569 = vmatprep.subr.mxu0 0.0
    %570 = vmatpush1.msra.mxu0 %v521
    %571 = vmatprep.subr.mxu0 0.0
    %572 = vmatpush1.msra.mxu0 %v520
    %573 = vmatprep.subr.mxu0 0.0
    %574 = vmatpush1.msra.mxu0 %v519
    %575 = vmatprep.subr.mxu0 0.0
    %576 = vmatpush2.msra.mxu0 0.0
    %577 = vmatprep.subr.mxu0 0.0
    %578 = vmatpush2.msra.mxu0 0.0
    %579 = vmatprep.subr.mxu0 0.0
    %580 = vmatpush2.msra.mxu0 0.0
    %581 = vmatprep.subr.mxu0 0.0
    %582 = vmatpush2.msra.mxu0 0.0
    %583 = vmatprep.subr.mxu0 0.0
    %584 = vmatpush2.msra.mxu0 0.0
    %585 = vmatprep.subr.mxu0 0.0
    %586 = vmatpush2.msra.mxu0 0.0
    %587 = vmatprep.subr.mxu0 0.0
    %588 = vmatpush2.msra.mxu0 0.0
    %589 = vmatprep.subr.mxu0 0.0
    %590 = vmatpush2.msra.mxu0 0.0
    %591 = vmatprep.subr.mxu0 0.0
    %592 = vmatpush2.msra.mxu0 0.0
    %593 = vmatprep.subr.mxu0 0.0
    %594 = vmatpush2.msra.mxu0 0.0
    %595 = vmatprep.subr.mxu0 0.0
    %596 = vmatpush2.msra.mxu0 0.0
    %597 = vmatprep.subr.mxu0 0.0
    %598 = vmatpush2.msra.mxu0 0.0
    %599 = vmatprep.subr.mxu0 0.0
    %600 = vmatpush2.msra.mxu0 0.0
    %601 = vmatprep.subr.mxu0 0.0
    %602 = vmatpush2.msra.mxu0 0.0
    %603 = vmatprep.subr.mxu0 0.0
    %604 = vmatpush2.msra.mxu0 0.0
    %605 = vmatprep.subr.mxu0 0.0
    %606 = vmatpush2.msra.mxu0 0.0
    %607 = vmatprep.mubr.f32.mxu0 0.0
    %608 = vmatmul.mubr.f32.gmra.mxu0 %v538
    %v609 = vpop.f32.mrf.mxu0
    %v610 = vadd.f32 %v530, %v609
    %v611 = vpop.f32.mrf.mxu0
    %612 = vmatprep.mubr.f32.mxu0 0.0
    %613 = vmatmul.mubr.f32.gmra.mxu0 %v541
    %v614 = vpop.f32.mrf.mxu0
    %v615 = vadd.f32 %v535, %v614
    %v616 = vpop.f32.mrf.mxu0
    %617 = vdwg.mxu0
    %vm618 = vcmp.gt.f32.partialorder %v610, 0.0
    %vm619 = vcmp.gt.f32.partialorder %v615, 0.0
    %v620 = vmin.f32 %v610, 0.0
    %v621 = vmin.f32 %v615, 0.0
    %v622 = vmul.f32 %v620, 1.442695
    %v623 = vpow.pop %v622
    %v624 = vmul.f32 %v621, 1.442695
    %v625 = vpow.pop %v624
    %v626 = vsub.f32 %v623, 1.0
    %v627 = vsub.f32 %v625, 1.0
    %v628 = vsel %vm618, %v610, %v626
    %v629 = vsel %vm619, %v615, %v627
    %s630 = sxor.u32 %s441, 2000006
    %v631 = vstv %s630
    %v632 = vxor.u32 %v450, %v631
    %v633 = vxor.u32 %v451, %v631
    %v634 = vshra.s32 %v632, 16
    %v635 = vshra.s32 %v633, 16
    %v636 = vand.u32 %v634, 65535
    %v637 = vand.u32 %v635, 65535
    %v638 = vxor.u32 %v632, %v636
    %v639 = vxor.u32 %v633, %v637
    %v640 = vmul.u32 %v638, 2146121005
    %v641 = vmul.u32 %v639, 2146121005
    %v642 = vshra.s32 %v640, 15
    %v643 = vshra.s32 %v641, 15
    %v644 = vand.u32 %v642, 131071
    %v645 = vand.u32 %v643, 131071
    %v646 = vxor.u32 %v640, %v644
    %v647 = vxor.u32 %v641, %v645
    %v648 = vmul.u32 %v646, 2221668491
    %v649 = vmul.u32 %v647, 2221668491
    %v650 = vshra.s32 %v648, 16
    %v651 = vshra.s32 %v649, 16
    %v652 = vand.u32 %v650, 65535
    %v653 = vand.u32 %v651, 65535
    %v654 = vxor.u32 %v648, %v652
    %v655 = vxor.u32 %v649, %v653
    %v656 = vshra.s32 %v654, 8
    %v657 = vshra.s32 %v655, 8
    %v658 = vand.u32 %v656, 16777215
    %v659 = vand.u32 %v657, 16777215
    %vm660 = vcmp.lt.s32.totalorder %v658, 13421773
    %vm661 = vcmp.lt.s32.totalorder %v659, 13421773
    %v662 = vmul.f32 %v628, 1.25
    %v663 = vmul.f32 %v629, 1.25
    %v664 = vsel %vm660, %v662, 0.0
    %v665 = vsel %vm661, %v663, 0.0
    %v666 = vld [vmem:[#allocation9] sm:$0xff]
    %v667 = vld [vmem:[%s10] sm:$0xff]
    %669 = vset.pattern.permute.xlu0 0
    %670 = vperm.xlu0 %669, %v667
    %v671 = vpop.permute.xlu0 %670
    %vm673 = vcmask 130048
    %v675 = vsel %vm673, %v666, 0
    %677 = vmatprep.subr.mxu0 0.0
    %678 = vmatpush1.msra.mxu0 0.0
    %679 = vmatprep.subr.mxu0 0.0
    %680 = vmatpush1.msra.mxu0 0.0
    %681 = vmatprep.subr.mxu0 0.0
    %682 = vmatpush1.msra.mxu0 0.0
    %683 = vmatprep.subr.mxu0 0.0
    %684 = vmatpush1.msra.mxu0 0.0
    %685 = vmatprep.subr.mxu0 0.0
    %686 = vmatpush1.msra.mxu0 0.0
    %687 = vmatprep.subr.mxu0 0.0
    %688 = vmatpush1.msra.mxu0 0.0
    %689 = vmatprep.subr.mxu0 0.0
    %690 = vmatpush1.msra.mxu0 0.0
    %691 = vmatprep.subr.mxu0 0.0
    %692 = vmatpush1.msra.mxu0 0.0
    %693 = vmatprep.subr.mxu0 0.0
    %694 = vmatpush1.msra.mxu0 0.0
    %695 = vmatprep.subr.mxu0 0.0
    %696 = vmatpush1.msra.mxu0 0.0
    %697 = vmatprep.subr.mxu0 0.0
    %698 = vmatpush1.msra.mxu0 0.0
    %699 = vmatprep.subr.mxu0 0.0
    %700 = vmatpush1.msra.mxu0 0.0
    %701 = vmatprep.subr.mxu0 0.0
    %702 = vmatpush1.msra.mxu0 0.0
    %703 = vmatprep.subr.mxu0 0.0
    %704 = vmatpush1.msra.mxu0 0.0
    %705 = vmatprep.subr.mxu0 0.0
    %706 = vmatpush1.msra.mxu0 %v665
    %707 = vmatprep.subr.mxu0 0.0
    %708 = vmatpush1.msra.mxu0 %v664
    %709 = vmatprep.subr.mxu0 0.0
    %710 = vmatpush2.msra.mxu0 0.0
    %711 = vmatprep.subr.mxu0 0.0
    %712 = vmatpush2.msra.mxu0 0.0
    %713 = vmatprep.subr.mxu0 0.0
    %714 = vmatpush2.msra.mxu0 0.0
    %715 = vmatprep.subr.mxu0 0.0
    %716 = vmatpush2.msra.mxu0 0.0
    %717 = vmatprep.subr.mxu0 0.0
    %718 = vmatpush2.msra.mxu0 0.0
    %719 = vmatprep.subr.mxu0 0.0
    %720 = vmatpush2.msra.mxu0 0.0
    %721 = vmatprep.subr.mxu0 0.0
    %722 = vmatpush2.msra.mxu0 0.0
    %723 = vmatprep.subr.mxu0 0.0
    %724 = vmatpush2.msra.mxu0 0.0
    %725 = vmatprep.subr.mxu0 0.0
    %726 = vmatpush2.msra.mxu0 0.0
    %727 = vmatprep.subr.mxu0 0.0
    %728 = vmatpush2.msra.mxu0 0.0
    %729 = vmatprep.subr.mxu0 0.0
    %730 = vmatpush2.msra.mxu0 0.0
    %731 = vmatprep.subr.mxu0 0.0
    %732 = vmatpush2.msra.mxu0 0.0
    %733 = vmatprep.subr.mxu0 0.0
    %734 = vmatpush2.msra.mxu0 0.0
    %735 = vmatprep.subr.mxu0 0.0
    %736 = vmatpush2.msra.mxu0 0.0
    %737 = vmatprep.subr.mxu0 0.0
    %738 = vmatpush2.msra.mxu0 0.0
    %739 = vmatprep.subr.mxu0 0.0
    %740 = vmatpush2.msra.mxu0 0.0
    %741 = vmatprep.mubr.f32.mxu0 0.0
    %742 = vmatmul.mubr.f32.gmra.mxu0 %v675
    %v743 = vpop.f32.mrf.mxu0
    %v744 = vadd.f32 %v671, %v743
    %v745 = vpop.f32.mrf.mxu0
    %746 = vdwg.mxu0
    %vm747 = vcmp.gt.f32.partialorder %v744, 0.0
    %v748 = vmin.f32 %v744, 0.0
    %v749 = vmul.f32 %v748, 1.442695
    %v750 = vpow.pop %v749
    %v751 = vsub.f32 %v750, 1.0
    %v752 = vsel %vm747, %v744, %v751
    %s753 = sxor.u32 %s441, 3000009
    %v754 = vstv %s753
    %v755 = vxor.u32 %v450, %v754
    %v756 = vshra.s32 %v755, 16
    %v757 = vand.u32 %v756, 65535
    %v758 = vxor.u32 %v755, %v757
    %v759 = vmul.u32 %v758, 2146121005
    %v760 = vshra.s32 %v759, 15
    %v761 = vand.u32 %v760, 131071
    %v762 = vxor.u32 %v759, %v761
    %v763 = vmul.u32 %v762, 2221668491
    %v764 = vshra.s32 %v763, 16
    %v765 = vand.u32 %v764, 65535
    %v766 = vxor.u32 %v763, %v765
    %v767 = vshra.s32 %v766, 8
    %v768 = vand.u32 %v767, 16777215
    %vm769 = vcmp.lt.s32.totalorder %v768, 13421773
    %v770 = vmul.f32 %v752, 1.25
    %v771 = vsel %vm769, %v770, 0.0
    %v772 = vld [vmem:[%s11] sm:$0xff]
    %774 = vset.pattern.permute.xlu0 0
    %775 = vperm.xlu0 %774, %v772
    %v776 = vpop.permute.xlu0 %775
    %v778 = vmul.f32 %v771, %v776
    %vm779 = vcmask 64512
    %v780 = vsel %vm779, %v778, 0.0
    %v781 = vrot.slane %v780, 4
    %v782 = vadd.f32 %v780, %v781
    %v783 = vrot.slane %v782, 2
    %v784 = vadd.f32 %v782, %v783
    %v785 = vrot.slane %v784, 1
    %v786 = vadd.f32 %v784, %v785
    %v787 = vld [vmem:[#allocation3] sm:$0x1]
    %789 = vset.pattern.permute.xlu0 0
    %790 = vperm.xlu0 %789, %v787
    %v791 = vpop.permute.xlu0 %790
    %v793 = vlaneseq
    %v794 = vshrl.u32 %v793, 7
    %v795 = vsub.s32 0, %v794
    %v796 = vrot.slane %v791, %v795
    %v797 = vadd.f32 %v786, %v796
    %vm798 = vcmask 57344
    %799 = vst.msk [vmem:[#allocation10] sm:$0x1] %vm798, %v797
    // Predicated region
    $region66: #{tpu_custom_call.1} parent=1 // pred_check
      _
    $region67: #{tpu_custom_call.1} parent=1 // pred_check_branch
      %801 = sbr.rel (0) target = $region69
    $region68: #{tpu_custom_call.1} parent=1 // pred_region
      %s803 = ssub.s32 16, 16
      %804 = vsyncadd [#allocation6], %s803
      %s806 = sshll.u32 [#allocation10], 4
      %s807 = int_to_ptr.vmem [resolvable:$true] %s806
      %809 = dma.vmem_to_hbm [thread:$0]  %s807, 16, %s13, [#allocation6]
    $region69: #{tpu_custom_call.1} parent=1 // pred_fallthru
      _
    // Predicated region
    $region70: #{tpu_custom_call.1} parent=1 // pred_check
      _
    $region71: #{tpu_custom_call.1} parent=1 // pred_check_branch
      %811 = sbr.rel (0) target = $region73
    $region72: #{tpu_custom_call.1} parent=1 // pred_region
      %812 = dma.done [#allocation6], 16
    $region73: #{tpu_custom_call.1} parent=1 // pred_fallthru
      _
    %813 = vsyncpa [#allocation5], 1
    %814 = vsyncpa [#allocation8], 1
    %815 = vsyncpa [#allocation6], 1

</llo_original>
